<compile_context>
chip_gen: v5e
topology: v5e:2x2
jax: 0.10.0
libtpu: 0.0.40
codegen_flags: <defaults>
</compile_context>

<pallas_src>
import functools

import jax
import jax.numpy as jnp
from jax.experimental import pallas as pl
from jax.experimental.pallas import tpu as pltpu

LANE = 128
SUBLANE = 8


def _round_up(x, m):
    return (x + m - 1) // m * m


# ----------------------------------------------------------------------------
# Fused kernel: initial ReLU + L GCN layers + log_softmax, one invocation.
# ----------------------------------------------------------------------------
def _fused_weighted_gcn_kernel(feat_ref, adj_ref, w_ref, b_ref, o_ref,
                               *, n_layers, n_classes):
    a = adj_ref[...]                                  # (N_pad, N_pad) f32
    h = jnp.maximum(feat_ref[...], 0.0)               # initial activation folded in
    for l in range(n_layers):                         # static unroll over layers
        support = jnp.dot(h, w_ref[l], preferred_element_type=jnp.float32)
        out = jnp.dot(a, support, preferred_element_type=jnp.float32) + b_ref[l]
        h = jnp.maximum(out, 0.0)                     # activation after every layer
    # log_softmax over the real class columns only (padded lanes masked out).
    col = jax.lax.broadcasted_iota(jnp.int32, h.shape, dimension=1)
    logits = jnp.where(col < n_classes, h, -1e30)
    m = jnp.max(logits, axis=-1, keepdims=True)
    z = logits - m
    lse = jnp.log(jnp.sum(jnp.exp(z), axis=-1, keepdims=True))
    o_ref[...] = (z - lse).astype(o_ref.dtype)


# ----------------------------------------------------------------------------
# Wrapper: pad to lane/sublane-friendly shapes, single pallas_call, slice out.
# ----------------------------------------------------------------------------
@jax.jit
def weighted_gcn_forward(features, adj, params):
    n, f_in = features.shape
    n_layers = len(params)
    n_classes = params[-1][0].shape[1]

    dims = [f_in] + [d for (w, _) in params for d in (w.shape[0], w.shape[1])]
    f_pad = _round_up(max(LANE, max(dims)), LANE)
    n_pad = _round_up(n, SUBLANE)

    feat_p = jnp.zeros((n_pad, f_pad), jnp.float32).at[:n, :f_in].set(features)
    adj_p = jnp.zeros((n_pad, n_pad), jnp.float32).at[:n, :n].set(adj)
    w_stack = jnp.stack([
        jnp.zeros((f_pad, f_pad), jnp.float32).at[:w.shape[0], :w.shape[1]].set(w)
        for (w, _) in params])
    b_stack = jnp.stack([
        jnp.zeros((1, f_pad), jnp.float32).at[:, :b.shape[1]].set(b)
        for (_, b) in params])

    full = lambda shape: pl.BlockSpec(shape, lambda: (0,) * len(shape))
    kernel = functools.partial(_fused_weighted_gcn_kernel,
                               n_layers=n_layers, n_classes=n_classes)

    out_pad = pl.pallas_call(
        kernel,
        out_shape=jax.ShapeDtypeStruct((n_pad, f_pad), jnp.float32),
        grid=(),
        in_specs=[full(feat_p.shape), full(adj_p.shape),
                  full(w_stack.shape), full(b_stack.shape)],
        out_specs=full((n_pad, f_pad)),
        compiler_params=pltpu.CompilerParams(vmem_limit_bytes=32 << 20),
    )(feat_p, adj_p, w_stack, b_stack)

    return out_pad[:n, :n_classes]


# ----------------------------------------------------------------------------
# Pure-JAX reference (same semantics) for a correctness check.
# ----------------------------------------------------------------------------
def reference_forward(features, adj, params):
    h = jnp.maximum(features, 0.0)
    for (w, b) in params:
        s = jnp.dot(h, w, precision=jax.lax.Precision.HIGHEST)
        h = jnp.maximum(jnp.dot(adj, s, precision=jax.lax.Precision.HIGHEST) + b, 0.0)
    return jax.nn.log_softmax(h, axis=1)


# ----------------------------------------------------------------------------
# Deterministic parameter init (GraphConvolution.reset_parameters style:
# uniform(-1/sqrt(F_out), 1/sqrt(F_out)) for both weight and bias).
# ----------------------------------------------------------------------------
def init_params(key, in_feats, n_hidden, n_classes, n_layers):
    dims = [(in_feats, n_hidden)]
    dims += [(n_hidden, n_hidden)] * (n_layers - 1)
    dims += [(n_hidden, n_classes)]
    params = []
    for (fi, fo) in dims:
        key, kw, kb = jax.random.split(key, 3)
        stdv = 1.0 / (fo ** 0.5)
        w = jax.random.uniform(kw, (fi, fo), jnp.float32, -stdv, stdv)
        b = jax.random.uniform(kb, (1, fo), jnp.float32, -stdv, stdv)
        params.append((w, b))
    return params


# ----------------------------------------------------------------------------
# Main
# ----------------------------------------------------------------------------
if __name__ == "__main__":
    N = 16          # number of graph nodes
    in_feats = 32
    n_hidden = 32
    n_classes = 8
    n_layers = 2    # -> 3 GCN layers total: 32->32, 32->32, 32->8

    key = jax.random.PRNGKey(0)
    k_feat, k_adj, k_param = jax.random.split(key, 3)

    features = jax.random.normal(k_feat, (N, in_feats), jnp.float32)

    # Simple symmetric normalized adjacency with self-loops (dense).
    raw = (jax.random.uniform(k_adj, (N, N)) > 0.7).astype(jnp.float32)
    a = jnp.maximum(raw, raw.T) + jnp.eye(N, dtype=jnp.float32)
    deg = jnp.sum(a, axis=1)
    d_inv_sqrt = 1.0 / jnp.sqrt(deg)
    adj = a * d_inv_sqrt[:, None] * d_inv_sqrt[None, :]

    params = init_params(k_param, in_feats, n_hidden, n_classes, n_layers)

    out = weighted_gcn_forward(features, adj, params)
    jax.block_until_ready(out)

    # correctness: match pure-JAX reference and valid log-prob rows
    ref = reference_forward(features, adj, params)
    assert out.shape == (N, n_classes)
    assert bool(jnp.all(jnp.abs(out - ref) < 2e-3))
    row_sums = jnp.sum(jnp.exp(out), axis=1)
    assert bool(jnp.all(jnp.abs(row_sums - 1.0) < 1e-4))

    print("KERNEL_OK")
</pallas_src>

<mosaic_0001>
module attributes {stable_mosaic.version = 11 : i64} {
  func.func @_fused_weighted_gcn_kernel(%arg0: memref<16x128xf32, #tpu.memory_space<vmem>>, %arg1: memref<16x16xf32, #tpu.memory_space<vmem>>, %arg2: memref<3x128x128xf32, #tpu.memory_space<vmem>>, %arg3: memref<3x1x128xf32, #tpu.memory_space<vmem>>, %arg4: memref<16x128xf32, #tpu.memory_space<vmem>>) attributes {dimension_semantics = [], scalar_prefetch = 0 : i64, scratch_operands = 0 : i64, tpu.core_type = #tpu.core_type<tc>} {
    %c0 = arith.constant 0 : index
    %c0_0 = arith.constant 0 : index
    %0 = vector.load %arg1[%c0, %c0_0] : memref<16x16xf32, #tpu.memory_space<vmem>>, vector<16x16xf32>
    %c0_1 = arith.constant 0 : index
    %c0_2 = arith.constant 0 : index
    %1 = vector.load %arg0[%c0_1, %c0_2] : memref<16x128xf32, #tpu.memory_space<vmem>>, vector<16x128xf32>
    %cst = arith.constant 0.000000e+00 : f32
    %2 = vector.broadcast %cst : f32 to vector<16x128xf32>
    %3 = arith.maximumf %1, %2 : vector<16x128xf32>
    %c0_3 = arith.constant 0 : index
    %c0_4 = arith.constant 0 : index
    %c0_5 = arith.constant 0 : index
    %4 = vector.load %arg2[%c0_3, %c0_4, %c0_5] : memref<3x128x128xf32, #tpu.memory_space<vmem>>, vector<1x128x128xf32>
    %5 = vector.shape_cast %4 : vector<1x128x128xf32> to vector<128x128xf32>
    %cst_6 = arith.constant dense<0.000000e+00> : vector<16x128xf32>
    %6 = tpu.matmul %3, %5, %cst_6 {dimension_numbers = #tpu.dot_dimension_numbers<[1], [0], [0], [1], [0, 0, 1, 1], [], []>} : vector<16x128xf32>, vector<128x128xf32>, vector<16x128xf32> -> vector<16x128xf32>
    %cst_7 = arith.constant dense<0.000000e+00> : vector<16x128xf32>
    %7 = tpu.matmul %0, %6, %cst_7 {dimension_numbers = #tpu.dot_dimension_numbers<[1], [0], [0], [1], [0, 0, 1, 1], [], []>} : vector<16x16xf32>, vector<16x128xf32>, vector<16x128xf32> -> vector<16x128xf32>
    %c0_8 = arith.constant 0 : index
    %c0_9 = arith.constant 0 : index
    %c0_10 = arith.constant 0 : index
    %8 = vector.load %arg3[%c0_8, %c0_9, %c0_10] : memref<3x1x128xf32, #tpu.memory_space<vmem>>, vector<1x1x128xf32>
    %9 = vector.shape_cast %8 : vector<1x1x128xf32> to vector<1x128xf32>
    %10 = vector.broadcast %9 : vector<1x128xf32> to vector<16x128xf32>
    %11 = arith.addf %7, %10 : vector<16x128xf32>
    %cst_11 = arith.constant 0.000000e+00 : f32
    %12 = vector.broadcast %cst_11 : f32 to vector<16x128xf32>
    %13 = arith.maximumf %11, %12 : vector<16x128xf32>
    %c1 = arith.constant 1 : index
    %c0_12 = arith.constant 0 : index
    %c0_13 = arith.constant 0 : index
    %14 = vector.load %arg2[%c1, %c0_12, %c0_13] : memref<3x128x128xf32, #tpu.memory_space<vmem>>, vector<1x128x128xf32>
    %15 = vector.shape_cast %14 : vector<1x128x128xf32> to vector<128x128xf32>
    %cst_14 = arith.constant dense<0.000000e+00> : vector<16x128xf32>
    %16 = tpu.matmul %13, %15, %cst_14 {dimension_numbers = #tpu.dot_dimension_numbers<[1], [0], [0], [1], [0, 0, 1, 1], [], []>} : vector<16x128xf32>, vector<128x128xf32>, vector<16x128xf32> -> vector<16x128xf32>
    %cst_15 = arith.constant dense<0.000000e+00> : vector<16x128xf32>
    %17 = tpu.matmul %0, %16, %cst_15 {dimension_numbers = #tpu.dot_dimension_numbers<[1], [0], [0], [1], [0, 0, 1, 1], [], []>} : vector<16x16xf32>, vector<16x128xf32>, vector<16x128xf32> -> vector<16x128xf32>
    %c1_16 = arith.constant 1 : index
    %c0_17 = arith.constant 0 : index
    %c0_18 = arith.constant 0 : index
    %18 = vector.load %arg3[%c1_16, %c0_17, %c0_18] : memref<3x1x128xf32, #tpu.memory_space<vmem>>, vector<1x1x128xf32>
    %19 = vector.shape_cast %18 : vector<1x1x128xf32> to vector<1x128xf32>
    %20 = vector.broadcast %19 : vector<1x128xf32> to vector<16x128xf32>
    %21 = arith.addf %17, %20 : vector<16x128xf32>
    %cst_19 = arith.constant 0.000000e+00 : f32
    %22 = vector.broadcast %cst_19 : f32 to vector<16x128xf32>
    %23 = arith.maximumf %21, %22 : vector<16x128xf32>
    %c2 = arith.constant 2 : index
    %c0_20 = arith.constant 0 : index
    %c0_21 = arith.constant 0 : index
    %24 = vector.load %arg2[%c2, %c0_20, %c0_21] : memref<3x128x128xf32, #tpu.memory_space<vmem>>, vector<1x128x128xf32>
    %25 = vector.shape_cast %24 : vector<1x128x128xf32> to vector<128x128xf32>
    %cst_22 = arith.constant dense<0.000000e+00> : vector<16x128xf32>
    %26 = tpu.matmul %23, %25, %cst_22 {dimension_numbers = #tpu.dot_dimension_numbers<[1], [0], [0], [1], [0, 0, 1, 1], [], []>} : vector<16x128xf32>, vector<128x128xf32>, vector<16x128xf32> -> vector<16x128xf32>
    %cst_23 = arith.constant dense<0.000000e+00> : vector<16x128xf32>
    %27 = tpu.matmul %0, %26, %cst_23 {dimension_numbers = #tpu.dot_dimension_numbers<[1], [0], [0], [1], [0, 0, 1, 1], [], []>} : vector<16x16xf32>, vector<16x128xf32>, vector<16x128xf32> -> vector<16x128xf32>
    %c2_24 = arith.constant 2 : index
    %c0_25 = arith.constant 0 : index
    %c0_26 = arith.constant 0 : index
    %28 = vector.load %arg3[%c2_24, %c0_25, %c0_26] : memref<3x1x128xf32, #tpu.memory_space<vmem>>, vector<1x1x128xf32>
    %29 = vector.shape_cast %28 : vector<1x1x128xf32> to vector<1x128xf32>
    %30 = vector.broadcast %29 : vector<1x128xf32> to vector<16x128xf32>
    %31 = arith.addf %27, %30 : vector<16x128xf32>
    %cst_27 = arith.constant 0.000000e+00 : f32
    %32 = vector.broadcast %cst_27 : f32 to vector<16x128xf32>
    %33 = arith.maximumf %31, %32 : vector<16x128xf32>
    %34 = tpu.iota {dimensions = array<i32: 1>} : vector<16x128xi32>
    %c8_i32 = arith.constant 8 : i32
    %35 = vector.broadcast %c8_i32 : i32 to vector<16x128xi32>
    %36 = arith.cmpi slt, %34, %35 : vector<16x128xi32>
    %cst_28 = arith.constant -1.000000e+30 : f32
    %37 = vector.broadcast %cst_28 : f32 to vector<16x128xf32>
    %38 = arith.select %36, %33, %37 : vector<16x128xi1>, vector<16x128xf32>
    %cst_29 = arith.constant dense<0xFF800000> : vector<16xf32>
    %39 = vector.multi_reduction <maximumf>, %38, %cst_29 [1] : vector<16x128xf32> to vector<16xf32>
    %40 = vector.shape_cast %39 : vector<16xf32> to vector<16x1xf32>
    %41 = vector.broadcast %40 : vector<16x1xf32> to vector<16x128xf32>
    %42 = arith.subf %38, %41 : vector<16x128xf32>
    %43 = math.exp %42 : vector<16x128xf32>
    %cst_30 = arith.constant dense<0.000000e+00> : vector<16xf32>
    %44 = vector.multi_reduction <add>, %43, %cst_30 [1] : vector<16x128xf32> to vector<16xf32>
    %45 = vector.shape_cast %44 : vector<16xf32> to vector<16x1xf32>
    %46 = math.log %45 : vector<16x1xf32>
    %47 = vector.broadcast %46 : vector<16x1xf32> to vector<16x128xf32>
    %48 = arith.subf %42, %47 : vector<16x128xf32>
    %c0_31 = arith.constant 0 : index
    %c0_32 = arith.constant 0 : index
    %49 = vector.load %arg4[%c0_31, %c0_32] : memref<16x128xf32, #tpu.memory_space<vmem>>, vector<16x128xf32>
    tpu.vector_store %arg4[%c0_31, %c0_32], %48 {strides = array<i32>} : memref<16x128xf32, #tpu.memory_space<vmem>>, vector<16x128xf32>,
    return
  }
}

</mosaic_0001>

<llo_original>
// kernel: weighted_gcn_forward.1
$region0: #{weighted_gcn_forward.1}
  #allocation0 [shape = 'u32[]', space=smem, size = 0x4, offset = 0x4, fixed_abs, tag = 'smem constant byte address 0x4 - core index']
  #allocation1 [shape = 'u32[72,128]{1,0:T(1,128)}', space=vmem, size = 0x9000, scoped, tag = 'internal scratch']
  %s0 = inlined_call_operand.vmem [shape: f32[16,128], index: 0, kind: input, shape index: {}]
  %s1 = inlined_call_operand.vmem [shape: f32[16,16], index: 1, kind: input, shape index: {}]
  %s2 = inlined_call_operand.vmem [shape: f32[3,128,128], index: 2, kind: input, shape index: {}]
  %s3 = inlined_call_operand.vmem [shape: f32[3,1,128], index: 3, kind: input, shape index: {}]
  %s4 = inlined_call_operand.vmem [shape: f32[16,128], index: 4, kind: output, shape index: {}]
  %s5 = sld [smem:[#allocation0]]
  $region26: #{weighted_gcn_forward.1} parent=0
    _
  %s7 = ssub.s32 1, %s5
  %s8 = scalar_select 0, %s7, %s5
  // Predicated region
  $region2: #{weighted_gcn_forward.1} parent=0 // pred_check
    _
  $region3: #{weighted_gcn_forward.1} parent=0 // pred_check_branch
    %10 = sbr.rel (0) target = $region5
  $region4: #{weighted_gcn_forward.1} parent=0 // pred_region
    _
  $region5: #{weighted_gcn_forward.1} parent=0 // pred_fallthru
    _
  // Predicated region
  $region6: #{weighted_gcn_forward.1} parent=0 // pred_check
    _
  $region7: #{weighted_gcn_forward.1} parent=0 // pred_check_branch
    %12 = sbr.rel (0) target = $region9
  $region8: #{weighted_gcn_forward.1} parent=0 // pred_region
    _
  $region9: #{weighted_gcn_forward.1} parent=0 // pred_fallthru
    _
  // Predicated region
  $region10: #{weighted_gcn_forward.1} parent=0 // pred_check
    _
  $region11: #{weighted_gcn_forward.1} parent=0 // pred_check_branch
    %14 = sbr.rel (0) target = $region13
  $region12: #{weighted_gcn_forward.1} parent=0 // pred_region
    _
  $region13: #{weighted_gcn_forward.1} parent=0 // pred_fallthru
    _
  // Predicated region
  $region14: #{weighted_gcn_forward.1} parent=0 // pred_check
    _
  $region15: #{weighted_gcn_forward.1} parent=0 // pred_check_branch
    %16 = sbr.rel (0) target = $region17
  $region16: #{weighted_gcn_forward.1} parent=0 // pred_region
    _
  $region17: #{weighted_gcn_forward.1} parent=0 // pred_fallthru
    _
  %v17 = vld [vmem:[%s1] sm:$0xff]
  %v18 = vld [vmem:[%s1 + $0x8] sm:$0xff]
  %v19 = vld [vmem:[%s0] sm:$0xff]
  %v20 = vld [vmem:[%s0 + $0x8] sm:$0xff]
  %v21 = vmax.f32 %v19, 0.0
  %v22 = vmax.f32 %v20, 0.0
  %v23 = vld [vmem:[%s2] sm:$0xff]
  %v24 = vld [vmem:[%s2 + $0x8] sm:$0xff]
  %v25 = vld [vmem:[%s2 + $0x10] sm:$0xff]
  %v26 = vld [vmem:[%s2 + $0x18] sm:$0xff]
  %v27 = vld [vmem:[%s2 + $0x20] sm:$0xff]
  %v28 = vld [vmem:[%s2 + $0x28] sm:$0xff]
  %v29 = vld [vmem:[%s2 + $0x30] sm:$0xff]
  %v30 = vld [vmem:[%s2 + $0x38] sm:$0xff]
  %v31 = vld [vmem:[%s2 + $0x40] sm:$0xff]
  %v32 = vld [vmem:[%s2 + $0x48] sm:$0xff]
  %v33 = vld [vmem:[%s2 + $0x50] sm:$0xff]
  %v34 = vld [vmem:[%s2 + $0x58] sm:$0xff]
  %v35 = vld [vmem:[%s2 + $0x60] sm:$0xff]
  %v36 = vld [vmem:[%s2 + $0x68] sm:$0xff]
  %v37 = vld [vmem:[%s2 + $0x70] sm:$0xff]
  %v38 = vld [vmem:[%s2 + $0x78] sm:$0xff]
  %39 = vmatpush.msra.mxu0 %v38
  %40 = vmatpush.msra.mxu0 %v37
  %41 = vmatpush.msra.mxu0 %v36
  %42 = vmatpush.msra.mxu0 %v35
  %43 = vmatpush.msra.mxu0 %v34
  %44 = vmatpush.msra.mxu0 %v33
  %45 = vmatpush.msra.mxu0 %v32
  %46 = vmatpush.msra.mxu0 %v31
  %47 = vmatpush.msra.mxu0 %v30
  %48 = vmatpush.msra.mxu0 %v29
  %49 = vmatpush.msra.mxu0 %v28
  %50 = vmatpush.msra.mxu0 %v27
  %51 = vmatpush.msra.mxu0 %v26
  %52 = vmatpush.msra.mxu0 %v25
  %53 = vmatpush.msra.mxu0 %v24
  %54 = vmatpush.msra.mxu0 %v23
  %55 = vmatmul.f32.gmra.mxu0 %v21
  %v56 = vpop.f32.mrf.mxu0
  %v57 = vadd.f32 0.0, %v56
  %58 = vmatmul.f32.gmra.mxu0 %v22
  %v59 = vpop.f32.mrf.mxu0
  %v60 = vadd.f32 0.0, %v59
  %61 = vdwg.mxu0
  %v62 = vld [vmem:[%s3] sm:$0x1]
  %v64 = vperm.slane %v62, 0
  %vm66 = vcmask 130048
  %v68 = vsel %vm66, %v17, 0
  %v71 = vsel %vm66, %v18, 0
  %73 = vmatpush.msra.mxu0 0.0
  %74 = vmatpush.msra.mxu0 0.0
  %75 = vmatpush.msra.mxu0 0.0
  %76 = vmatpush.msra.mxu0 0.0
  %77 = vmatpush.msra.mxu0 0.0
  %78 = vmatpush.msra.mxu0 0.0
  %79 = vmatpush.msra.mxu0 0.0
  %80 = vmatpush.msra.mxu0 0.0
  %81 = vmatpush.msra.mxu0 0.0
  %82 = vmatpush.msra.mxu0 0.0
  %83 = vmatpush.msra.mxu0 0.0
  %84 = vmatpush.msra.mxu0 0.0
  %85 = vmatpush.msra.mxu0 0.0
  %86 = vmatpush.msra.mxu0 0.0
  %87 = vmatpush.msra.mxu0 %v60
  %88 = vmatpush.msra.mxu0 %v57
  %89 = vmatmul.f32.gmra.mxu0 %v68
  %v90 = vpop.f32.mrf.mxu0
  %v91 = vadd.f32 %v64, %v90
  %92 = vmatmul.f32.gmra.mxu0 %v71
  %v93 = vpop.f32.mrf.mxu0
  %v94 = vadd.f32 %v64, %v93
  %95 = vdwg.mxu0
  %v96 = vmax.f32 %v91, 0.0
  %v97 = vmax.f32 %v94, 0.0
  %s98 = scalar_lea.vmem %s2, 128
  %v99 = vld [vmem:[%s98] sm:$0xff]
  %v100 = vld [vmem:[%s98 + $0x8] sm:$0xff]
  %v101 = vld [vmem:[%s98 + $0x10] sm:$0xff]
  %v102 = vld [vmem:[%s98 + $0x18] sm:$0xff]
  %v103 = vld [vmem:[%s98 + $0x20] sm:$0xff]
  %v104 = vld [vmem:[%s98 + $0x28] sm:$0xff]
  %v105 = vld [vmem:[%s98 + $0x30] sm:$0xff]
  %v106 = vld [vmem:[%s98 + $0x38] sm:$0xff]
  %v107 = vld [vmem:[%s98 + $0x40] sm:$0xff]
  %v108 = vld [vmem:[%s98 + $0x48] sm:$0xff]
  %v109 = vld [vmem:[%s98 + $0x50] sm:$0xff]
  %v110 = vld [vmem:[%s98 + $0x58] sm:$0xff]
  %v111 = vld [vmem:[%s98 + $0x60] sm:$0xff]
  %v112 = vld [vmem:[%s98 + $0x68] sm:$0xff]
  %v113 = vld [vmem:[%s98 + $0x70] sm:$0xff]
  %v114 = vld [vmem:[%s98 + $0x78] sm:$0xff]
  %115 = vmatpush.msra.mxu0 %v114
  %116 = vmatpush.msra.mxu0 %v113
  %117 = vmatpush.msra.mxu0 %v112
  %118 = vmatpush.msra.mxu0 %v111
  %119 = vmatpush.msra.mxu0 %v110
  %120 = vmatpush.msra.mxu0 %v109
  %121 = vmatpush.msra.mxu0 %v108
  %122 = vmatpush.msra.mxu0 %v107
  %123 = vmatpush.msra.mxu0 %v106
  %124 = vmatpush.msra.mxu0 %v105
  %125 = vmatpush.msra.mxu0 %v104
  %126 = vmatpush.msra.mxu0 %v103
  %127 = vmatpush.msra.mxu0 %v102
  %128 = vmatpush.msra.mxu0 %v101
  %129 = vmatpush.msra.mxu0 %v100
  %130 = vmatpush.msra.mxu0 %v99
  %131 = vmatmul.f32.gmra.mxu0 %v96
  %v132 = vpop.f32.mrf.mxu0
  %v133 = vadd.f32 0.0, %v132
  %134 = vmatmul.f32.gmra.mxu0 %v97
  %v135 = vpop.f32.mrf.mxu0
  %v136 = vadd.f32 0.0, %v135
  %137 = vdwg.mxu0
  %s138 = scalar_lea.vmem %s3, 1
  %v139 = vld [vmem:[%s138] sm:$0x1]
  %v141 = vperm.slane %v139, 0
  %143 = vmatpush.msra.mxu0 0.0
  %144 = vmatpush.msra.mxu0 0.0
  %145 = vmatpush.msra.mxu0 0.0
  %146 = vmatpush.msra.mxu0 0.0
  %147 = vmatpush.msra.mxu0 0.0
  %148 = vmatpush.msra.mxu0 0.0
  %149 = vmatpush.msra.mxu0 0.0
  %150 = vmatpush.msra.mxu0 0.0
  %151 = vmatpush.msra.mxu0 0.0
  %152 = vmatpush.msra.mxu0 0.0
  %153 = vmatpush.msra.mxu0 0.0
  %154 = vmatpush.msra.mxu0 0.0
  %155 = vmatpush.msra.mxu0 0.0
  %156 = vmatpush.msra.mxu0 0.0
  %157 = vmatpush.msra.mxu0 %v136
  %158 = vmatpush.msra.mxu0 %v133
  %159 = vmatmul.f32.gmra.mxu0 %v68
  %v160 = vpop.f32.mrf.mxu0
  %v161 = vadd.f32 %v141, %v160
  %162 = vmatmul.f32.gmra.mxu0 %v71
  %v163 = vpop.f32.mrf.mxu0
  %v164 = vadd.f32 %v141, %v163
  %165 = vdwg.mxu0
  %v166 = vmax.f32 %v161, 0.0
  %v167 = vmax.f32 %v164, 0.0
  %s168 = scalar_lea.vmem %s2, 256
  %v169 = vld [vmem:[%s168] sm:$0xff]
  %v170 = vld [vmem:[%s168 + $0x8] sm:$0xff]
  %v171 = vld [vmem:[%s168 + $0x10] sm:$0xff]
  %v172 = vld [vmem:[%s168 + $0x18] sm:$0xff]
  %v173 = vld [vmem:[%s168 + $0x20] sm:$0xff]
  %v174 = vld [vmem:[%s168 + $0x28] sm:$0xff]
  %v175 = vld [vmem:[%s168 + $0x30] sm:$0xff]
  %v176 = vld [vmem:[%s168 + $0x38] sm:$0xff]
  %v177 = vld [vmem:[%s168 + $0x40] sm:$0xff]
  %v178 = vld [vmem:[%s168 + $0x48] sm:$0xff]
  %v179 = vld [vmem:[%s168 + $0x50] sm:$0xff]
  %v180 = vld [vmem:[%s168 + $0x58] sm:$0xff]
  %v181 = vld [vmem:[%s168 + $0x60] sm:$0xff]
  %v182 = vld [vmem:[%s168 + $0x68] sm:$0xff]
  %v183 = vld [vmem:[%s168 + $0x70] sm:$0xff]
  %v184 = vld [vmem:[%s168 + $0x78] sm:$0xff]
  %185 = vmatpush.msra.mxu0 %v184
  %186 = vmatpush.msra.mxu0 %v183
  %187 = vmatpush.msra.mxu0 %v182
  %188 = vmatpush.msra.mxu0 %v181
  %189 = vmatpush.msra.mxu0 %v180
  %190 = vmatpush.msra.mxu0 %v179
  %191 = vmatpush.msra.mxu0 %v178
  %192 = vmatpush.msra.mxu0 %v177
  %193 = vmatpush.msra.mxu0 %v176
  %194 = vmatpush.msra.mxu0 %v175
  %195 = vmatpush.msra.mxu0 %v174
  %196 = vmatpush.msra.mxu0 %v173
  %197 = vmatpush.msra.mxu0 %v172
  %198 = vmatpush.msra.mxu0 %v171
  %199 = vmatpush.msra.mxu0 %v170
  %200 = vmatpush.msra.mxu0 %v169
  %201 = vmatmul.f32.gmra.mxu0 %v166
  %v202 = vpop.f32.mrf.mxu0
  %v203 = vadd.f32 0.0, %v202
  %204 = vmatmul.f32.gmra.mxu0 %v167
  %v205 = vpop.f32.mrf.mxu0
  %v206 = vadd.f32 0.0, %v205
  %207 = vdwg.mxu0
  %s208 = scalar_lea.vmem %s3, 2
  %v209 = vld [vmem:[%s208] sm:$0x1]
  %v211 = vperm.slane %v209, 0
  %213 = vmatpush.msra.mxu0 0.0
  %214 = vmatpush.msra.mxu0 0.0
  %215 = vmatpush.msra.mxu0 0.0
  %216 = vmatpush.msra.mxu0 0.0
  %217 = vmatpush.msra.mxu0 0.0
  %218 = vmatpush.msra.mxu0 0.0
  %219 = vmatpush.msra.mxu0 0.0
  %220 = vmatpush.msra.mxu0 0.0
  %221 = vmatpush.msra.mxu0 0.0
  %222 = vmatpush.msra.mxu0 0.0
  %223 = vmatpush.msra.mxu0 0.0
  %224 = vmatpush.msra.mxu0 0.0
  %225 = vmatpush.msra.mxu0 0.0
  %226 = vmatpush.msra.mxu0 0.0
  %227 = vmatpush.msra.mxu0 %v206
  %228 = vmatpush.msra.mxu0 %v203
  %229 = vmatmul.f32.gmra.mxu0 %v68
  %v230 = vpop.f32.mrf.mxu0
  %v231 = vadd.f32 %v211, %v230
  %232 = vmatmul.f32.gmra.mxu0 %v71
  %v233 = vpop.f32.mrf.mxu0
  %v234 = vadd.f32 %v211, %v233
  %235 = vdwg.mxu0
  %v236 = vmax.f32 %v231, 0.0
  %v237 = vmax.f32 %v234, 0.0
  %v238 = vlaneseq
  %v239 = vand.u32 %v238, 127
  %vm240 = vcmp.lt.s32.totalorder %v239, 8
  %v241 = vsel %vm240, %v236, -1e+30
  %v242 = vsel %vm240, %v237, -1e+30
  %243 = vmax.xlane.f32.xlu0 %v241
  %v244 = vpop.xlane.xlu0 %243
  %245 = vmax.xlane.f32.xlu0 %v242
  %v246 = vpop.xlane.xlu0 %245
  %v247 = vsub.f32 %v241, %v244
  %v248 = vsub.f32 %v242, %v246
  %v249 = vmul.f32 %v247, 1.442695
  %v250 = vpow.pop %v249
  %v251 = vmul.f32 %v248, 1.442695
  %v252 = vpow.pop %v251
  %253 = vadd.xlane.f32.xlu0 %v250
  %v254 = vpop.xlane.xlu0 %253
  %255 = vadd.xlane.f32.xlu0 %v252
  %v256 = vpop.xlane.xlu0 %255
  %v257 = vlog2.pop %v254
  %v258 = vmul.f32 %v257, 0.6931472
  %v259 = vlog2.pop %v256
  %v260 = vmul.f32 %v259, 0.6931472
  %v261 = vsub.f32 %v247, %v258
  %v262 = vsub.f32 %v248, %v260
  %263 = vst [vmem:[%s4] sm:$0xff] %v261
  %264 = vst [vmem:[%s4 + $0x8] sm:$0xff] %v262
  // Predicated region
  $region18: #{weighted_gcn_forward.1} parent=0 // pred_check
    _
  $region19: #{weighted_gcn_forward.1} parent=0 // pred_check_branch
    %266 = sbr.rel (0) target = $region21
  $region20: #{weighted_gcn_forward.1} parent=0 // pred_region
    _
  $region21: #{weighted_gcn_forward.1} parent=0 // pred_fallthru
    _
  // Predicated region
  $region22: #{weighted_gcn_forward.1} parent=0 // pred_check
    _
  $region23: #{weighted_gcn_forward.1} parent=0 // pred_check_branch
    %268 = sbr.rel (0) target = $region25
  $region24: #{weighted_gcn_forward.1} parent=0 // pred_region
    _
  $region25: #{weighted_gcn_forward.1} parent=0 // pred_fallthru
    _

</llo_original>
